<compile_context>
chip_gen: v5e
topology: v5e:2x2
jax: 0.10.0
libtpu: 0.0.40
codegen_flags: <defaults>
</compile_context>

<pallas_src>
import functools

import jax
import jax.numpy as jnp
from jax.experimental import pallas as pl
from jax.experimental.pallas import tpu as pltpu


def _round_up(x, m):
    return ((x + m - 1) // m) * m


def _round_down(x, m):
    return (x // m) * m


def _per_buffer_budget_bytes():
    """Byte budget for one (input-tile + output-tile) streaming buffer pair.

    v7x: 64 MiB VMEM per TensorCore -> keep 2x(in+out) buffers ~12 MiB total.
    v5e/v6e: 128 MiB VMEM -> allow much larger tiles (fewer grid steps).
    """
    try:
        info = pltpu.get_tpu_info()
        vmem = getattr(info, "vmem_capacity_bytes", None)
        if vmem is not None and vmem >= (96 << 20):
            return 16 << 20          # v5e / v6e (128 MiB VMEM)
    except Exception:
        pass
    return 6 << 20                   # v7x (64 MiB VMEM) or unknown: conservative


# ----------------------------------------------------------------------------
# Pallas kernel: per-pixel classifier (1x1 conv == (K,C) @ (C, HW_tile) + bias)
# ----------------------------------------------------------------------------
def _conv_seg_kernel(x_ref, w_ref, b_ref, o_ref):
    # x_ref: (1, C, t)   w_ref: (K, C)   b_ref: (K, 1) f32   o_ref: (1, K, t)
    acc = jnp.dot(w_ref[...], x_ref[0], preferred_element_type=jnp.float32)
    o_ref[0] = (acc + b_ref[...]).astype(o_ref.dtype)


@functools.partial(
    jax.jit, static_argnames=("tile_hw", "out_dtype", "target_buffer_bytes"))
def conv_seg_1x1(x_nchw, weight_kc, bias_k, *, tile_hw=None, out_dtype=None,
                 target_buffer_bytes=None):
    """1x1 conv: out[n,k,h,w] = sum_c weight[k,c] * x[n,c,h,w] + bias[k].

    Operates directly on NCHW (no wrapper transposes / pads / slices); the
    matmul orientation (K, C) @ (C, HW_tile) makes the output lane-dense.
    """
    n, c, h, w = x_nchw.shape
    k = weight_kc.shape[0]
    hw = h * w
    out_dtype = x_nchw.dtype if out_dtype is None else out_dtype

    in_itemsize = jnp.dtype(x_nchw.dtype).itemsize
    out_itemsize = jnp.dtype(out_dtype).itemsize
    # Bytes streamed per HW lane: the (1,c,tile) input AND the (1,k,tile)
    # output are both double-buffered, so budget against their sum.
    per_lane_bytes = c * in_itemsize + k * out_itemsize

    if target_buffer_bytes is None:
        target_buffer_bytes = _per_buffer_budget_bytes()

    if tile_hw is not None:
        tile = _round_up(int(tile_hw), 128)                 # explicit override
    else:
        # Budget-derived tile; 2048 lanes is only a floor.
        tile = max(2048,
                   _round_down(int(target_buffer_bytes) // per_lane_bytes, 128))
    tile = max(128, min(tile, _round_up(hw, 128)))

    # Keep >= ~4 total grid steps (v7x megacore sharding + pipeline overlap).
    min_steps = 4
    if n * pl.cdiv(hw, tile) < min_steps:
        j_needed = -(-min_steps // n)                       # ceil(min_steps / n)
        tile = max(128, min(tile, _round_up(-(-hw // j_needed), 128)))

    grid = (n, pl.cdiv(hw, tile))                           # partial last block OK

    x = x_nchw.reshape(n, c, hw)             # free: contiguous trailing-dim merge
    w_kc = weight_kc.astype(x.dtype)         # tiny (K*C)
    b_k1 = bias_k.reshape(k, 1).astype(jnp.float32)

    # VMEM: double-buffered activation + output tiles, plus (double-buffered,
    # but fetched once) weight/bias blocks.  ~1.25x headroom for scratch.
    vmem_need = (2 * tile * per_lane_bytes
                 + 2 * (k * c * in_itemsize + k * 4))
    vmem_limit = int(min(max(int(1.25 * vmem_need), 16 << 20), 100 << 20))

    cost = pl.CostEstimate(
        flops=2 * n * hw * c * k,
        transcendentals=0,
        bytes_accessed=n * hw * per_lane_bytes + k * c * in_itemsize + k * 4,
    )

    out = pl.pallas_call(
        _conv_seg_kernel,
        out_shape=jax.ShapeDtypeStruct((n, k, hw), out_dtype),
        grid_spec=pltpu.PrefetchScalarGridSpec(
            num_scalar_prefetch=0,
            grid=grid,
            in_specs=[
                pl.BlockSpec((1, c, tile), lambda i, j: (i, 0, j)),  # activations
                pl.BlockSpec((k, c), lambda i, j: (0, 0)),           # full weight
                pl.BlockSpec((k, 1), lambda i, j: (0, 0)),           # bias column
            ],
            out_specs=pl.BlockSpec((1, k, tile), lambda i, j: (i, 0, j)),
        ),
        compiler_params=pltpu.CompilerParams(
            dimension_semantics=("parallel", "parallel"),
            vmem_limit_bytes=vmem_limit,
        ),
        cost_estimate=cost,
    )(x, w_kc, b_k1)

    return out.reshape(n, k, h, w)            # free: contiguous trailing-dim split


# ----------------------------------------------------------------------------
# Module wrapper mirroring BaseDecodeHead_clips_flow's concrete forward pieces
# ----------------------------------------------------------------------------
class BaseDecodeHeadClipsFlowPallas:
    def __init__(self, in_channels, channels, *, num_classes,
                 dropout_ratio=0.1, in_index=-1, input_transform=None,
                 ignore_index=255, align_corners=False, num_clips=5,
                 key=jax.random.PRNGKey(0)):
        # TODO(synk): input_transform='resize_concat' / 'multiple_select'
        # (bilinear resize + concat) not implemented; only the default
        # single-select path is supported here.
        assert input_transform is None, "only input_transform=None supported here"
        assert isinstance(in_channels, int) and isinstance(in_index, int)
        self.in_channels = in_channels
        self.channels = channels
        self.num_classes = num_classes
        self.dropout_ratio = dropout_ratio
        self.in_index = in_index
        self.input_transform = input_transform
        self.ignore_index = ignore_index
        self.align_corners = align_corners
        self.num_clips = num_clips

        # conv_seg = nn.Conv2d(channels, num_classes, kernel_size=1)
        # init_weights(): normal(mean=0, std=0.01), bias=0.
        wk, = jax.random.split(key, 1)
        self.conv_seg_weight = (
            0.01 * jax.random.normal(wk, (num_classes, channels), dtype=jnp.float32)
        )
        self.conv_seg_bias = jnp.zeros((num_classes,), dtype=jnp.float32)

    def _transform_inputs(self, inputs):
        # input_transform is None -> single feature-map select.
        return inputs[self.in_index]

    def cls_seg(self, feat):
        """Classify each pixel (eval-mode: Dropout2d is identity)."""
        # TODO(synk): training-mode Dropout2d (channel-wise Bernoulli mask) not
        # implemented; eval/inference semantics (identity) are used.
        return conv_seg_1x1(feat, self.conv_seg_weight, self.conv_seg_bias)

    def forward(self, inputs, batch_size, num_clips, img=None):
        """Minimal concrete forward: select features, classify each pixel,
        reshape to the (B, num_clips, num_classes, H, W) convention used by
        the loss path of this head."""
        x = self._transform_inputs(inputs)          # (B*num_clips, C, H, W)
        logits = self.cls_seg(x)                    # (B*num_clips, K, H, W)
        n, k, h, w = logits.shape
        return logits.reshape(batch_size, num_clips, k, h, w)


# ----------------------------------------------------------------------------
# Reference (pure-JAX) implementation for correctness check
# ----------------------------------------------------------------------------
def _ref_conv_seg(x_nchw, weight_kc, bias_k):
    # out[n,k,h,w] = sum_c w[k,c] x[n,c,h,w] + b[k]
    return (jnp.einsum("nchw,kc->nkhw", x_nchw.astype(jnp.float32),
                       weight_kc.astype(jnp.float32),
                       precision=jax.lax.Precision.HIGHEST)
            + bias_k[None, :, None, None])


if __name__ == "__main__":
    key = jax.random.PRNGKey(0)
    k_feat, k_params = jax.random.split(key)

    batch_size = 2
    num_clips = 2
    channels = 32           # decoder feature channels (== in_channels)
    num_classes = 8
    H, W = 16, 15           # H*W not a multiple of 128 -> exercises the
                            # masked partial last block (no wrapper pad/slice)
    N = batch_size * num_clips

    head = BaseDecodeHeadClipsFlowPallas(
        in_channels=channels, channels=channels, num_classes=num_classes,
        dropout_ratio=0.1, in_index=-1, input_transform=None,
        num_clips=num_clips, key=k_params,
    )

    # Multi-level feature list (as produced by a backbone); in_index=-1 selects
    # the last one.  Dummy lower level just exercises _transform_inputs.
    feat_main = jax.random.normal(k_feat, (N, channels, H, W), dtype=jnp.float32)
    inputs = [jnp.zeros((N, channels, H, W), jnp.float32), feat_main]

    ref = _ref_conv_seg(feat_main, head.conv_seg_weight, head.conv_seg_bias)
    ref = ref.reshape(batch_size, num_clips, num_classes, H, W)

    # --- f32 path (default MXU precision may use bf16 passes -> modest tol) ---
    out_f32 = head.forward(inputs, batch_size, num_clips)
    out_f32 = jax.block_until_ready(out_f32)
    assert out_f32.shape == (batch_size, num_clips, num_classes, H, W)
    assert jnp.allclose(out_f32, ref, atol=2e-3, rtol=1e-2)

    # --- bf16 streaming path (memory-bound production config; looser check) ---
    inputs_bf16 = [f.astype(jnp.bfloat16) for f in inputs]
    out_bf16 = head.forward(inputs_bf16, batch_size, num_clips)
    out_bf16 = jax.block_until_ready(out_bf16)
    assert out_bf16.shape == (batch_size, num_clips, num_classes, H, W)
    assert jnp.allclose(out_bf16.astype(jnp.float32), ref, atol=8e-3, rtol=5e-2)

    print("KERNEL_OK")
</pallas_src>

<mosaic_0001>
module attributes {stable_mosaic.version = 11 : i64} {
  func.func @_conv_seg_kernel(%arg0: i32, %arg1: i32, %arg2: memref<1x32x256xf32, #tpu.memory_space<vmem>>, %arg3: memref<8x32xf32, #tpu.memory_space<vmem>>, %arg4: memref<8x1xf32, #tpu.memory_space<vmem>>, %arg5: memref<1x8x256xf32, #tpu.memory_space<vmem>>) attributes {dimension_semantics = [#tpu.dimension_semantics<parallel>, #tpu.dimension_semantics<parallel>], iteration_bounds = array<i64: 4, 1>, scalar_prefetch = 0 : i64, scratch_operands = 0 : i64, tpu.core_type = #tpu.core_type<tc>, window_params = [{transform_indices = @transform_0, window_bounds = array<i64: 1, 32, 256>}, {pipeline_mode = #tpu.pipeline_mode<synchronous>, transform_indices = @transform_1, window_bounds = array<i64: 8, 32>}, {pipeline_mode = #tpu.pipeline_mode<synchronous>, transform_indices = @transform_2, window_bounds = array<i64: 8, 1>}, {transform_indices = @transform_3, window_bounds = array<i64: 1, 8, 256>}]} {
    %c0 = arith.constant 0 : index
    %c0_0 = arith.constant 0 : index
    %0 = vector.load %arg3[%c0, %c0_0] : memref<8x32xf32, #tpu.memory_space<vmem>>, vector<8x32xf32>
    %c0_1 = arith.constant 0 : index
    %c0_2 = arith.constant 0 : index
    %c0_3 = arith.constant 0 : index
    %1 = vector.load %arg2[%c0_1, %c0_2, %c0_3] : memref<1x32x256xf32, #tpu.memory_space<vmem>>, vector<1x32x256xf32>
    %2 = vector.shape_cast %1 : vector<1x32x256xf32> to vector<32x256xf32>
    %cst = arith.constant dense<0.000000e+00> : vector<8x256xf32>
    %3 = tpu.matmul %0, %2, %cst {dimension_numbers = #tpu.dot_dimension_numbers<[1], [0], [0], [1], [0, 0, 1, 1], [], []>} : vector<8x32xf32>, vector<32x256xf32>, vector<8x256xf32> -> vector<8x256xf32>
    %c0_4 = arith.constant 0 : index
    %c0_5 = arith.constant 0 : index
    %4 = vector.load %arg4[%c0_4, %c0_5] : memref<8x1xf32, #tpu.memory_space<vmem>>, vector<8x1xf32>
    %5 = vector.broadcast %4 : vector<8x1xf32> to vector<8x256xf32>
    %6 = arith.addf %3, %5 : vector<8x256xf32>
    %c0_6 = arith.constant 0 : index
    %c0_7 = arith.constant 0 : index
    %c0_8 = arith.constant 0 : index
    %7 = vector.load %arg5[%c0_6, %c0_7, %c0_8] : memref<1x8x256xf32, #tpu.memory_space<vmem>>, vector<1x8x256xf32>
    %8 = vector.shape_cast %7 : vector<1x8x256xf32> to vector<8x256xf32>
    %9 = vector.shape_cast %6 : vector<8x256xf32> to vector<1x8x256xf32>
    tpu.vector_store %arg5[%c0_6, %c0_7, %c0_8], %9 {strides = array<i32>} : memref<1x8x256xf32, #tpu.memory_space<vmem>>, vector<1x8x256xf32>,
    return
  }
  func.func @transform_0(%arg0: i32, %arg1: i32) -> (i32, i32, i32) {
    %c0_i32 = arith.constant 0 : i32
    %c0_i32_0 = arith.constant 0 : i32
    return %arg0, %c0_i32, %arg1 : i32, i32, i32
  }
  func.func @transform_1(%arg0: i32, %arg1: i32) -> (i32, i32) {
    %c0_i32 = arith.constant 0 : i32
    %c0_i32_0 = arith.constant 0 : i32
    %c0_i32_1 = arith.constant 0 : i32
    return %c0_i32, %c0_i32_0 : i32, i32
  }
  func.func @transform_2(%arg0: i32, %arg1: i32) -> (i32, i32) {
    %c0_i32 = arith.constant 0 : i32
    %c0_i32_0 = arith.constant 0 : i32
    %c0_i32_1 = arith.constant 0 : i32
    return %c0_i32, %c0_i32_0 : i32, i32
  }
  func.func @transform_3(%arg0: i32, %arg1: i32) -> (i32, i32, i32) {
    %c0_i32 = arith.constant 0 : i32
    %c0_i32_0 = arith.constant 0 : i32
    return %arg0, %c0_i32, %arg1 : i32, i32, i32
  }
}

</mosaic_0001>

<llo_original>
// kernel: conv_seg_1x1.1
$region0: #{conv_seg_1x1.1}
  #allocation0 [shape = 'u32[]', space=smem, size = 0x4, offset = 0x4, fixed_abs, tag = 'smem constant byte address 0x4 - core index']
  #allocation1 [shape = 'u32[72,128]{1,0:T(1,128)}', space=vmem, size = 0x9000, scoped, tag = 'internal scratch']
  %s0 = inlined_call_operand.vmem [shape: f32[4,32,240], index: 0, kind: input, shape index: {}]
  %s1 = inlined_call_operand.vmem [shape: f32[8,32], index: 1, kind: input, shape index: {}]
  %s2 = inlined_call_operand.vmem [shape: f32[8,1], index: 2, kind: input, shape index: {}]
  %s3 = inlined_call_operand.vmem [shape: f32[4,8,240], index: 3, kind: output, shape index: {}]
  %s4 = sld [smem:[#allocation0]]
  $region45: #{conv_seg_1x1.1} parent=0
    _
  %s6 = ssub.s32 1, %s4
  %s7 = scalar_select 0, %s6, %s4
  loop: start=0, step=1, limit=6
  $region2: #{conv_seg_1x1.1} parent=0 // loop_pre_header
    _
  $region3: #{conv_seg_1x1.1} parent=0 // loop_header
    %s9 = sphi 0, %s13
    %p10 = scmp.ge.s32.totalorder %s9, 6
    %s16 = sphi 0, %s28
    %s17 = sphi 0, %s24
    %s18 = sphi 0, %s16
    %s19 = sphi 0, %s17
    %s20 = sphi 0, %s18
    %s21 = sphi 0, %s19
    %s33 = sphi 0, %s35
    %s36 = sphi 0, %s33
    %s37 = sphi 0, %s36
    %s53 = sphi 0, %s37
    %s57 = sphi 0, %s57
    %s59 = sphi 0, %s57
    %s60 = sphi 0, %s59
    %s74 = sphi 0, %s60
    %s78 = sphi 0, %s78
    %s80 = sphi 0, %s78
    %s81 = sphi 0, %s80
    %s95 = sphi 0, %s81
    %s103 = sphi 0, %s105
    %s106 = sphi 0, %s103
    %s107 = sphi 0, %s106
    %s123 = sphi 0, %s107
  $region4: #{conv_seg_1x1.1} parent=0 // loop_header_branch
    %12 = sbr.rel (%p10) target = $region8
  $region5: #{conv_seg_1x1.1} parent=0 // loop_body
    %s14 = ssub.s32 %s9, 1
    %s15 = ssub.s32 %s9, 2
    %s22 = sadd.s32 1, %s17
    %p23 = scmp.ge.s32.totalorder %s22, 1
    %s24 = scalar_select %p23, 0, %s22
    %s25 = sadd.s32 1, %s16
    %s26 = scalar_select %p23, %s25, %s16
    %p27 = scmp.ge.s32.totalorder %s26, 4
    %s28 = scalar_select %p27, 0, %s26
    %s29 = ssub.s32 %s16, %s28
    %s30 = ssub.s32 %s17, %s24
    %s31 = sor.u32 %s29, %s30
    %p32 = scmp.eq.s32.totalorder %s31, 0
    %s34 = sadd.s32 %s33, 1
    %s35 = scalar_select %p32, %s33, %s34
    %p38 = pneg %p32
    %p39 = scmp.eq.s32.totalorder %s9, 3
    %p40 = por %p38, %p39
    %p41 = scmp.ne.s32.totalorder %s33, %s36
    %p42 = scmp.eq.s32.totalorder %s9, 0
    %p43 = por %p41, %p42
    %p44 = scmp.ne.s32.totalorder %s33, %s36
    %p45 = scmp.eq.s32.totalorder %s14, 3
    %p46 = por %p44, %p45
    %p47 = scmp.ne.s32.totalorder %s36, %s37
    %p48 = scmp.eq.s32.totalorder %s14, 0
    %p49 = por %p47, %p48
    %p50 = scmp.ne.s32.totalorder %s36, %s37
    %p51 = scmp.eq.s32.totalorder %s15, 3
    %p52 = por %p50, %p51
    %p54 = scmp.ne.s32.totalorder %s37, %s53
    %p55 = scmp.eq.s32.totalorder %s15, 0
    %p56 = por %p54, %p55
    %s58 = sadd.s32 %s57, 1
    %p61 = scmp.eq.s32.totalorder %s9, 3
    %p62 = scmp.ne.s32.totalorder %s57, %s59
    %p63 = scmp.eq.s32.totalorder %s9, 0
    %p64 = por %p62, %p63
    %p65 = scmp.ne.s32.totalorder %s57, %s59
    %p66 = scmp.eq.s32.totalorder %s14, 3
    %p67 = por %p65, %p66
    %p68 = scmp.ne.s32.totalorder %s59, %s60
    %p69 = scmp.eq.s32.totalorder %s14, 0
    %p70 = por %p68, %p69
    %p71 = scmp.ne.s32.totalorder %s59, %s60
    %p72 = scmp.eq.s32.totalorder %s15, 3
    %p73 = por %p71, %p72
    %p75 = scmp.ne.s32.totalorder %s60, %s74
    %p76 = scmp.eq.s32.totalorder %s15, 0
    %p77 = por %p75, %p76
    %s79 = sadd.s32 %s78, 1
    %p82 = scmp.eq.s32.totalorder %s9, 3
    %p83 = scmp.ne.s32.totalorder %s78, %s80
    %p84 = scmp.eq.s32.totalorder %s9, 0
    %p85 = por %p83, %p84
    %p86 = scmp.ne.s32.totalorder %s78, %s80
    %p87 = scmp.eq.s32.totalorder %s14, 3
    %p88 = por %p86, %p87
    %p89 = scmp.ne.s32.totalorder %s80, %s81
    %p90 = scmp.eq.s32.totalorder %s14, 0
    %p91 = por %p89, %p90
    %p92 = scmp.ne.s32.totalorder %s80, %s81
    %p93 = scmp.eq.s32.totalorder %s15, 3
    %p94 = por %p92, %p93
    %p96 = scmp.ne.s32.totalorder %s81, %s95
    %p97 = scmp.eq.s32.totalorder %s15, 0
    %p98 = por %p96, %p97
    %s99 = ssub.s32 %s16, %s28
    %s100 = ssub.s32 %s17, %s24
    %s101 = sor.u32 %s99, %s100
    %p102 = scmp.eq.s32.totalorder %s101, 0
    %s104 = sadd.s32 %s103, 1
    %s105 = scalar_select %p102, %s103, %s104
    %p108 = pneg %p102
    %p109 = scmp.eq.s32.totalorder %s9, 3
    %p110 = por %p108, %p109
    %p111 = scmp.ne.s32.totalorder %s103, %s106
    %p112 = scmp.eq.s32.totalorder %s9, 0
    %p113 = por %p111, %p112
    %p114 = scmp.ne.s32.totalorder %s103, %s106
    %p115 = scmp.eq.s32.totalorder %s14, 3
    %p116 = por %p114, %p115
    %p117 = scmp.ne.s32.totalorder %s106, %s107
    %p118 = scmp.eq.s32.totalorder %s14, 0
    %p119 = por %p117, %p118
    %p120 = scmp.ne.s32.totalorder %s106, %s107
    %p121 = scmp.eq.s32.totalorder %s15, 3
    %p122 = por %p120, %p121
    %p124 = scmp.ne.s32.totalorder %s107, %s123
    %p125 = scmp.eq.s32.totalorder %s15, 0
    %p126 = por %p124, %p125
    %p127 = scmp.le.s32.totalorder 1, %s9
    %p128 = scmp.lt.s32.totalorder %s9, 5
    %p129 = pnand %p127, %p128
    %p130 = pneg %p129
    // Predicated region
    $region9: #{conv_seg_1x1.1} parent=5 // pred_check
      _
    $region10: #{conv_seg_1x1.1} parent=5 // pred_check_branch
      %132 = sbr.rel (%p129) target = $region12
    $region11: #{conv_seg_1x1.1} parent=5 // pred_region
      %s133 = ssub.s32 %s9, 1
      // Predicated region
      $region13: #{conv_seg_1x1.1} parent=11 // pred_check
        %p134 = pneg %p70
      $region14: #{conv_seg_1x1.1} parent=11 // pred_check_branch
        %136 = sbr.rel (%p134) target = $region16
      $region15: #{conv_seg_1x1.1} parent=11 // pred_region
        _
      $region16: #{conv_seg_1x1.1} parent=11 // pred_fallthru
        _
      // Predicated region
      $region17: #{conv_seg_1x1.1} parent=11 // pred_check
        %p137 = pneg %p91
      $region18: #{conv_seg_1x1.1} parent=11 // pred_check_branch
        %139 = sbr.rel (%p137) target = $region20
      $region19: #{conv_seg_1x1.1} parent=11 // pred_region
        _
      $region20: #{conv_seg_1x1.1} parent=11 // pred_fallthru
        _
    $region12: #{conv_seg_1x1.1} parent=5 // pred_fallthru
      _
    %p140 = scmp.lt.s32.totalorder %s9, 4
    // Predicated region
    $region21: #{conv_seg_1x1.1} parent=5 // pred_check
      %p141 = pneg %p140
    $region22: #{conv_seg_1x1.1} parent=5 // pred_check_branch
      %143 = sbr.rel (%p141) target = $region24
    $region23: #{conv_seg_1x1.1} parent=5 // pred_region
      // Predicated region
      $region25: #{conv_seg_1x1.1} parent=23 // pred_check
        %p144 = pneg %p43
      $region26: #{conv_seg_1x1.1} parent=23 // pred_check_branch
        %146 = sbr.rel (%p144) target = $region28
      $region27: #{conv_seg_1x1.1} parent=23 // pred_region
        %s147 = smul.u32 2, %s17
        %p148 = scmp.lt.s32.totalorder %s16, 3
        %s149 = scalar_select %p148, %s16, 3
        %p150 = scmp.lt.s32.totalorder %s147, 1
        %s151 = scalar_select %p150, %s147, 1
        %s152 = smul.addr %s149, 8
        %s153 = sadd.s32 %s151, %s152
        %s154 = smul.addr %s153, 8
        %s155 = scalar_lea.vmem %s0, %s154
        %s156 = smul.u32 2, %s17
      $region28: #{conv_seg_1x1.1} parent=23 // pred_fallthru
        _
    $region24: #{conv_seg_1x1.1} parent=5 // pred_fallthru
      _
    %p157 = scmp.le.s32.totalorder 1, %s9
    %p158 = scmp.lt.s32.totalorder %s9, 5
    %p159 = pnand %p157, %p158
    %p160 = pneg %p159
    // Predicated region
    $region29: #{conv_seg_1x1.1} parent=5 // pred_check
      _
    $region30: #{conv_seg_1x1.1} parent=5 // pred_check_branch
      %162 = sbr.rel (%p159) target = $region32
    $region31: #{conv_seg_1x1.1} parent=5 // pred_region
      %s163 = ssub.s32 %s9, 1
      %s164 = smul.u32 2, %s19
      %p165 = scmp.lt.s32.totalorder %s18, 3
      %s166 = scalar_select %p165, %s18, 3
      %p167 = scmp.lt.s32.totalorder %s164, 1
      %s168 = scalar_select %p167, %s164, 1
      %s169 = smul.addr %s166, 8
      %s170 = sadd.s32 %s168, %s169
      %s171 = smul.addr %s170, 8
      %s172 = scalar_lea.vmem %s0, %s171
      %p173 = pneg %p49
      %p174 = pneg %p46
      %p175 = pneg %p70
      %p176 = pneg %p67
      %p177 = pneg %p91
      %p178 = pneg %p88
      %p179 = pneg %p119
      %p180 = pneg %p116
      %s181 = smul.u32 2, %s19
      %p182 = scmp.lt.s32.totalorder %s18, 3
      %s183 = scalar_select %p182, %s18, 3
      %p184 = scmp.lt.s32.totalorder %s181, 1
      %s185 = scalar_select %p184, %s181, 1
      %s186 = smul.addr %s183, 2
      %s187 = sadd.s32 %s185, %s186
      %s188 = smul.addr %s187, 8
      %s189 = scalar_lea.vmem %s3, %s188
      %s190 = smul.u32 2, %s19
      %p191 = scmp.lt.s32.totalorder %s18, 3
      %s192 = scalar_select %p191, %s18, 3
      %p193 = scmp.lt.s32.totalorder %s190, 1
      %s194 = scalar_select %p193, %s190, 1
      %s195 = smul.addr %s192, 8
      %s196 = sadd.s32 %s194, %s195
      %s197 = smul.addr %s196, 8
      %s198 = scalar_lea.vmem %s0, %s197
      %s199 = smul.u32 2, %s19
      %s200 = smul.u32 2, %s19
      %p201 = scmp.lt.s32.totalorder %s18, 3
      %s202 = scalar_select %p201, %s18, 3
      %p203 = scmp.lt.s32.totalorder %s200, 1
      %s204 = scalar_select %p203, %s200, 1
      %s205 = smul.addr %s202, 2
      %s206 = sadd.s32 %s204, %s205
      %s207 = smul.addr %s206, 8
      %s208 = scalar_lea.vmem %s3, %s207
      %s209 = smul.u32 2, %s19
      %v210 = vld [vmem:[%s1] sm:$0xff]
      %v211 = vld [vmem:[%s198] sm:$0xff]
      %v212 = vld [vmem:[%s198 + $0x8] sm:$0xff]
      %v213 = vld [vmem:[%s198 + $0x10] sm:$0xff]
      %v214 = vld [vmem:[%s198 + $0x18] sm:$0xff]
      %v215 = vld [vmem:[%s198 + $0x20] sm:$0xff]
      %v216 = vld [vmem:[%s198 + $0x28] sm:$0xff]
      %v217 = vld [vmem:[%s198 + $0x30] sm:$0xff]
      %v218 = vld [vmem:[%s198 + $0x38] sm:$0xff]
      %v219 = vld [vmem:[%s2] sm:$0xff]
      %221 = vset.pattern.permute.xlu0 0
      %222 = vperm.xlu0 %221, %v219
      %v223 = vpop.permute.xlu0 %222
      %vm225 = vcmask 261120
      %v227 = vsel %vm225, %v210, 0
      %229 = vmatpush.msra.mxu0 0.0
      %230 = vmatpush.msra.mxu0 0.0
      %231 = vmatpush.msra.mxu0 0.0
      %232 = vmatpush.msra.mxu0 0.0
      %233 = vmatpush.msra.mxu0 0.0
      %234 = vmatpush.msra.mxu0 0.0
      %235 = vmatpush.msra.mxu0 0.0
      %236 = vmatpush.msra.mxu0 0.0
      %237 = vmatpush.msra.mxu0 0.0
      %238 = vmatpush.msra.mxu0 0.0
      %239 = vmatpush.msra.mxu0 0.0
      %240 = vmatpush.msra.mxu0 0.0
      %241 = vmatpush.msra.mxu0 %v217
      %242 = vmatpush.msra.mxu0 %v215
      %243 = vmatpush.msra.mxu0 %v213
      %244 = vmatpush.msra.mxu0 %v211
      %245 = vmatmul.f32.gmra.mxu0 %v227
      %v246 = vpop.f32.mrf.mxu0
      %v247 = vadd.f32 %v223, %v246
      %248 = vdwg.mxu0
      %249 = vmatpush.msra.mxu0 0.0
      %250 = vmatpush.msra.mxu0 0.0
      %251 = vmatpush.msra.mxu0 0.0
      %252 = vmatpush.msra.mxu0 0.0
      %253 = vmatpush.msra.mxu0 0.0
      %254 = vmatpush.msra.mxu0 0.0
      %255 = vmatpush.msra.mxu0 0.0
      %256 = vmatpush.msra.mxu0 0.0
      %257 = vmatpush.msra.mxu0 0.0
      %258 = vmatpush.msra.mxu0 0.0
      %259 = vmatpush.msra.mxu0 0.0
      %260 = vmatpush.msra.mxu0 0.0
      %261 = vmatpush.msra.mxu0 %v218
      %262 = vmatpush.msra.mxu0 %v216
      %263 = vmatpush.msra.mxu0 %v214
      %264 = vmatpush.msra.mxu0 %v212
      %265 = vmatmul.f32.gmra.mxu0 %v227
      %v266 = vpop.f32.mrf.mxu0
      %v267 = vadd.f32 %v223, %v266
      %268 = vdwg.mxu0
      %269 = vst [vmem:[%s208] sm:$0xff] %v247
      %270 = vst [vmem:[%s208 + $0x8] sm:$0xff] %v267
      %s271 = smul.u32 2, %s19
      %p272 = scmp.lt.s32.totalorder %s18, 3
      %s273 = scalar_select %p272, %s18, 3
      %p274 = scmp.lt.s32.totalorder %s271, 1
      %s275 = scalar_select %p274, %s271, 1
      %s276 = smul.addr %s273, 2
      %s277 = sadd.s32 %s275, %s276
      %s278 = smul.addr %s277, 8
      %s279 = scalar_lea.vmem %s3, %s278
      // Predicated region
      $region33: #{conv_seg_1x1.1} parent=31 // pred_check
        %p280 = pneg %p116
      $region34: #{conv_seg_1x1.1} parent=31 // pred_check_branch
        %282 = sbr.rel (%p280) target = $region36
      $region35: #{conv_seg_1x1.1} parent=31 // pred_region
        %s283 = smul.u32 2, %s19
      $region36: #{conv_seg_1x1.1} parent=31 // pred_fallthru
        _
    $region32: #{conv_seg_1x1.1} parent=5 // pred_fallthru
      _
    %p284 = scmp.le.s32.totalorder 2, %s9
    // Predicated region
    $region37: #{conv_seg_1x1.1} parent=5 // pred_check
      %p285 = pneg %p284
    $region38: #{conv_seg_1x1.1} parent=5 // pred_check_branch
      %287 = sbr.rel (%p285) target = $region40
    $region39: #{conv_seg_1x1.1} parent=5 // pred_region
      %s288 = ssub.s32 %s9, 2
      // Predicated region
      $region41: #{conv_seg_1x1.1} parent=39 // pred_check
        %p289 = pneg %p122
      $region42: #{conv_seg_1x1.1} parent=39 // pred_check_branch
        %291 = sbr.rel (%p289) target = $region44
      $region43: #{conv_seg_1x1.1} parent=39 // pred_region
        %s292 = smul.u32 2, %s21
        %p293 = scmp.lt.s32.totalorder %s20, 3
        %s294 = scalar_select %p293, %s20, 3
        %p295 = scmp.lt.s32.totalorder %s292, 1
        %s296 = scalar_select %p295, %s292, 1
        %s297 = smul.addr %s294, 2
        %s298 = sadd.s32 %s296, %s297
        %s299 = smul.addr %s298, 8
        %s300 = scalar_lea.vmem %s3, %s299
      $region44: #{conv_seg_1x1.1} parent=39 // pred_fallthru
        _
    $region40: #{conv_seg_1x1.1} parent=5 // pred_fallthru
      _
  $region6: #{conv_seg_1x1.1} parent=0 // loop_footer
    %s13 = sadd.s32 1, %s9
  $region7: #{conv_seg_1x1.1} parent=0 // loop_footer_branch
    %8 = sbr.rel target = $region3
  $region8: #{conv_seg_1x1.1} parent=0 // loop_exit
    _

</llo_original>
